<compile_context>
chip_gen: v7x
topology: tpu7x:2x2x1
jax: 0.10.0
libtpu: 0.0.40
codegen_flags: <defaults>
</compile_context>

<pallas_src>
import jax
import jax.numpy as jnp
from jax.experimental import pallas as pl
from jax.experimental.pallas import tpu as pltpu

HIDDEN1 = 64
HIDDEN2 = 32


def mlp_kernel(x_ref, w1_ref, b1_ref, w2_ref, b2_ref, w3_ref, b3_ref, o_ref):
    """One batch tile of the fused, batch-group-folded MLP.

    x_ref : (Tg, g*d_in)        f32   g batch rows folded per sublane row
    w*_ref: (g*in_f, g*out_f)   bf16  block-diagonal, transposed (x @ W) layout
    b*_ref: (1, g*out_f)        f32   broadcast along sublanes (pure VPU add)
    o_ref : (Tg, g*out_dim)     f32
    """
    cd = w1_ref.dtype

    # Layer 1: (Tg, g*d_in) @ (g*d_in, g*64) -> ReLU   (f32 accumulation)
    x = x_ref[...].astype(cd)
    h1 = jnp.dot(x, w1_ref[...], preferred_element_type=jnp.float32)
    h1 = jnp.maximum(h1 + b1_ref[...], 0.0)

    # Layer 2: (Tg, g*64) @ (g*64, g*32) -> ReLU
    h2 = jnp.dot(h1.astype(cd), w2_ref[...], preferred_element_type=jnp.float32)
    h2 = jnp.maximum(h2 + b2_ref[...], 0.0)

    # Layer 3: (Tg, g*32) @ (g*32, g*out_dim)          (no activation)
    h3 = jnp.dot(h2.astype(cd), w3_ref[...], preferred_element_type=jnp.float32)
    o_ref[...] = (h3 + b3_ref[...]).astype(o_ref.dtype)


def _default_group_factor():
    """g=4 fills a 256-wide MXU (v6e/v7x); cap at g=2 on 128-wide chips (v2-v5)."""
    try:
        kind = jax.devices()[0].device_kind.lower()
    except Exception:
        return 4
    if any(tag in kind for tag in ("v2", "v3", "v4", "v5")):
        return 2
    return 4


def _block_diag(w_t, g, dtype):
    """g-copy block-diagonal of w_t (in_f, out_f) -> (g*in_f, g*out_f)."""
    return jnp.kron(jnp.eye(g, dtype=w_t.dtype), w_t).astype(dtype)


def pack_params(params, g, compute_dtype=jnp.bfloat16):
    """Fold PyTorch-layout (out,in) f32 weights into g-block-diagonal transposed
    bf16 matrices and g-tiled f32 bias rows, ready for the folded kernel."""
    packed = []
    for i in (1, 2, 3):
        w = params[f"w{i}"]                              # (out_f, in_f) f32
        b = params[f"b{i}"]                              # (out_f,)      f32
        packed.append(_block_diag(w.T, g, compute_dtype))          # (g*in, g*out)
        packed.append(jnp.tile(b, g)[None, :].astype(jnp.float32))  # (1, g*out)
    return packed


def _round_up(x, m):
    return ((x + m - 1) // m) * m


def neural_network_forward(x, params, *, g=None, tile_b=8192, min_split_rows=2048):
    """x: (B, input_dim) f32 -> (B, out_dim) f32  (PyTorch NeuralNetwork.forward)."""
    if g is None:
        g = _default_group_factor()

    B, d_in = x.shape
    out_dim = params["w3"].shape[0]

    w1p, b1p, w2p, b2p, w3p, b3p = pack_params(params, g)

    # ---- Batch tiling ----------------------------------------------------
    align = g * 8                                # g rows fold into one sublane row
    b_aligned = _round_up(B, align)
    num_tiles = pl.cdiv(b_aligned, max(tile_b, align))
    if num_tiles == 1 and b_aligned >= 2 * min_split_rows:
        num_tiles = 2                            # v7x: let "parallel" use both TCs
    tile = _round_up(pl.cdiv(b_aligned, num_tiles), align)
    b_pad = num_tiles * tile                     # padding waste < num_tiles*align
    tg = tile // g                               # folded sublane rows per grid step

    # ---- Fold: pure reshape, zero data movement ---------------------------
    if b_pad != B:
        x = jnp.pad(x, ((0, b_pad - B), (0, 0)))
    xf = x.reshape(b_pad // g, g * d_in)         # row r <- batch rows r*g .. r*g+g-1

    resident = lambda i: (0, 0)                  # weights/biases: same block each step
    batch_tile = lambda i: (i, 0)                # activations: walk folded batch rows

    out_f = pl.pallas_call(
        mlp_kernel,
        out_shape=jax.ShapeDtypeStruct((b_pad // g, g * out_dim), jnp.float32),
        grid=(num_tiles,),
        in_specs=[
            pl.BlockSpec((tg, g * d_in), batch_tile),
            pl.BlockSpec(w1p.shape, resident),
            pl.BlockSpec(b1p.shape, resident),
            pl.BlockSpec(w2p.shape, resident),
            pl.BlockSpec(b2p.shape, resident),
            pl.BlockSpec(w3p.shape, resident),
            pl.BlockSpec(b3p.shape, resident),
        ],
        out_specs=pl.BlockSpec((tg, g * out_dim), batch_tile),
        compiler_params=pltpu.CompilerParams(
            dimension_semantics=("parallel",),       # v7x: shard tiles over 2 TCs
            vmem_limit_bytes=32 * 1024 * 1024,       # portable to v7x's 64 MiB VMEM
        ),
    )(xf, w1p, b1p, w2p, b2p, w3p, b3p)

    # ---- Unfold: pure reshape; drop batch padding --------------------------
    return out_f.reshape(b_pad, out_dim)[:B]


def init_params(key, input_dim, out_dim):
    """PyTorch nn.Linear default init; master weights kept f32 in (out, in) layout."""
    dims = [(input_dim, HIDDEN1), (HIDDEN1, HIDDEN2), (HIDDEN2, out_dim)]
    params = {}
    for i, (fan_in, fan_out) in enumerate(dims, start=1):
        key, kw, kb = jax.random.split(key, 3)
        bound = 1.0 / (fan_in ** 0.5)
        params[f"w{i}"] = jax.random.uniform(
            kw, (fan_out, fan_in), jnp.float32, -bound, bound)
        params[f"b{i}"] = jax.random.uniform(
            kb, (fan_out,), jnp.float32, -bound, bound)
    return params


def reference_forward(x, params):
    """Pure-JAX f32 reference with PyTorch semantics: x @ W.T + b."""
    h = jnp.maximum(x @ params["w1"].T + params["b1"], 0.0)
    h = jnp.maximum(h @ params["w2"].T + params["b2"], 0.0)
    return h @ params["w3"].T + params["b3"]


if __name__ == "__main__":
    input_dim, out_dim = 32, 16

    key = jax.random.PRNGKey(0)
    key, kx1, kx2 = jax.random.split(key, 3)
    params = init_params(key, input_dim, out_dim)

    # Case 1: tiny batch -> single grid step, batch padded only to g*8 rows.
    x_small = jax.random.normal(kx1, (8, input_dim), jnp.float32)
    out_small = jax.block_until_ready(neural_network_forward(x_small, params))
    ref_small = reference_forward(x_small, params)
    assert out_small.shape == (8, out_dim)
    # bf16 matmul operands -> loosened tolerance vs the pure-f32 reference.
    assert jnp.allclose(out_small, ref_small, atol=5e-2, rtol=5e-2), "small-batch mismatch"

    # Case 2: non-aligned batch -> multi-tile pipelined "parallel" grid,
    # exercises block-diagonal folding, padding, and the slice-off.
    x_big = jax.random.normal(kx2, (1000, input_dim), jnp.float32)
    out_big = jax.block_until_ready(
        neural_network_forward(x_big, params, tile_b=256))
    ref_big = reference_forward(x_big, params)
    assert out_big.shape == (1000, out_dim)
    assert jnp.allclose(out_big, ref_big, atol=5e-2, rtol=5e-2), "tiled-batch mismatch"

    print("KERNEL_OK")
</pallas_src>

<mosaic_0001>
module attributes {stable_mosaic.version = 11 : i64} {
  func.func @mlp_kernel(%arg0: i32, %arg1: memref<8x128xf32, #tpu.memory_space<vmem>>, %arg2: memref<128x256xbf16, #tpu.memory_space<vmem>>, %arg3: memref<1x256xf32, #tpu.memory_space<vmem>>, %arg4: memref<256x128xbf16, #tpu.memory_space<vmem>>, %arg5: memref<1x128xf32, #tpu.memory_space<vmem>>, %arg6: memref<128x64xbf16, #tpu.memory_space<vmem>>, %arg7: memref<1x64xf32, #tpu.memory_space<vmem>>, %arg8: memref<8x64xf32, #tpu.memory_space<vmem>>) attributes {dimension_semantics = [#tpu.dimension_semantics<parallel>], iteration_bounds = array<i64: 1>, scalar_prefetch = 0 : i64, scratch_operands = 0 : i64, tpu.core_type = #tpu.core_type<tc>, window_params = [{transform_indices = @transform_0, window_bounds = array<i64: 8, 128>}, {pipeline_mode = #tpu.pipeline_mode<synchronous>, transform_indices = @transform_1, window_bounds = array<i64: 128, 256>}, {pipeline_mode = #tpu.pipeline_mode<synchronous>, transform_indices = @transform_2, window_bounds = array<i64: 1, 256>}, {pipeline_mode = #tpu.pipeline_mode<synchronous>, transform_indices = @transform_3, window_bounds = array<i64: 256, 128>}, {pipeline_mode = #tpu.pipeline_mode<synchronous>, transform_indices = @transform_4, window_bounds = array<i64: 1, 128>}, {pipeline_mode = #tpu.pipeline_mode<synchronous>, transform_indices = @transform_5, window_bounds = array<i64: 128, 64>}, {pipeline_mode = #tpu.pipeline_mode<synchronous>, transform_indices = @transform_6, window_bounds = array<i64: 1, 64>}, {transform_indices = @transform_7, window_bounds = array<i64: 8, 64>}]} {
    %c0 = arith.constant 0 : index
    %c0_0 = arith.constant 0 : index
    %0 = vector.load %arg1[%c0, %c0_0] : memref<8x128xf32, #tpu.memory_space<vmem>>, vector<8x128xf32>
    %1 = arith.truncf %0 : vector<8x128xf32> to vector<8x128xbf16>
    %c0_1 = arith.constant 0 : index
    %c0_2 = arith.constant 0 : index
    %2 = vector.load %arg2[%c0_1, %c0_2] : memref<128x256xbf16, #tpu.memory_space<vmem>>, vector<128x256xbf16>
    %cst = arith.constant dense<0.000000e+00> : vector<8x256xf32>
    %3 = tpu.matmul %1, %2, %cst {dimension_numbers = #tpu.dot_dimension_numbers<[1], [0], [0], [1], [0, 0, 1, 1], [], []>} : vector<8x128xbf16>, vector<128x256xbf16>, vector<8x256xf32> -> vector<8x256xf32>
    %c0_3 = arith.constant 0 : index
    %c0_4 = arith.constant 0 : index
    %4 = vector.load %arg3[%c0_3, %c0_4] : memref<1x256xf32, #tpu.memory_space<vmem>>, vector<1x256xf32>
    %5 = vector.broadcast %4 : vector<1x256xf32> to vector<8x256xf32>
    %6 = arith.addf %3, %5 : vector<8x256xf32>
    %cst_5 = arith.constant 0.000000e+00 : f32
    %7 = vector.broadcast %cst_5 : f32 to vector<8x256xf32>
    %8 = arith.maximumf %6, %7 : vector<8x256xf32>
    %9 = arith.truncf %8 : vector<8x256xf32> to vector<8x256xbf16>
    %c0_6 = arith.constant 0 : index
    %c0_7 = arith.constant 0 : index
    %10 = vector.load %arg4[%c0_6, %c0_7] : memref<256x128xbf16, #tpu.memory_space<vmem>>, vector<256x128xbf16>
    %cst_8 = arith.constant dense<0.000000e+00> : vector<8x128xf32>
    %11 = tpu.matmul %9, %10, %cst_8 {dimension_numbers = #tpu.dot_dimension_numbers<[1], [0], [0], [1], [0, 0, 1, 1], [], []>} : vector<8x256xbf16>, vector<256x128xbf16>, vector<8x128xf32> -> vector<8x128xf32>
    %c0_9 = arith.constant 0 : index
    %c0_10 = arith.constant 0 : index
    %12 = vector.load %arg5[%c0_9, %c0_10] : memref<1x128xf32, #tpu.memory_space<vmem>>, vector<1x128xf32>
    %13 = vector.broadcast %12 : vector<1x128xf32> to vector<8x128xf32>
    %14 = arith.addf %11, %13 : vector<8x128xf32>
    %cst_11 = arith.constant 0.000000e+00 : f32
    %15 = vector.broadcast %cst_11 : f32 to vector<8x128xf32>
    %16 = arith.maximumf %14, %15 : vector<8x128xf32>
    %17 = arith.truncf %16 : vector<8x128xf32> to vector<8x128xbf16>
    %c0_12 = arith.constant 0 : index
    %c0_13 = arith.constant 0 : index
    %18 = vector.load %arg6[%c0_12, %c0_13] : memref<128x64xbf16, #tpu.memory_space<vmem>>, vector<128x64xbf16>
    %cst_14 = arith.constant dense<0.000000e+00> : vector<8x64xf32>
    %19 = tpu.matmul %17, %18, %cst_14 {dimension_numbers = #tpu.dot_dimension_numbers<[1], [0], [0], [1], [0, 0, 1, 1], [], []>} : vector<8x128xbf16>, vector<128x64xbf16>, vector<8x64xf32> -> vector<8x64xf32>
    %c0_15 = arith.constant 0 : index
    %c0_16 = arith.constant 0 : index
    %20 = vector.load %arg7[%c0_15, %c0_16] : memref<1x64xf32, #tpu.memory_space<vmem>>, vector<1x64xf32>
    %21 = vector.broadcast %20 : vector<1x64xf32> to vector<8x64xf32>
    %22 = arith.addf %19, %21 : vector<8x64xf32>
    %c0_17 = arith.constant 0 : index
    %c0_18 = arith.constant 0 : index
    %23 = vector.load %arg8[%c0_17, %c0_18] : memref<8x64xf32, #tpu.memory_space<vmem>>, vector<8x64xf32>
    tpu.vector_store %arg8[%c0_17, %c0_18], %22 {strides = array<i32>} : memref<8x64xf32, #tpu.memory_space<vmem>>, vector<8x64xf32>,
    return
  }
  func.func @transform_0(%arg0: i32) -> (i32, i32) {
    %c0_i32 = arith.constant 0 : i32
    %c0_i32_0 = arith.constant 0 : i32
    return %arg0, %c0_i32 : i32, i32
  }
  func.func @transform_1(%arg0: i32) -> (i32, i32) {
    %c0_i32 = arith.constant 0 : i32
    %c0_i32_0 = arith.constant 0 : i32
    %c0_i32_1 = arith.constant 0 : i32
    return %c0_i32, %c0_i32_0 : i32, i32
  }
  func.func @transform_2(%arg0: i32) -> (i32, i32) {
    %c0_i32 = arith.constant 0 : i32
    %c0_i32_0 = arith.constant 0 : i32
    %c0_i32_1 = arith.constant 0 : i32
    return %c0_i32, %c0_i32_0 : i32, i32
  }
  func.func @transform_3(%arg0: i32) -> (i32, i32) {
    %c0_i32 = arith.constant 0 : i32
    %c0_i32_0 = arith.constant 0 : i32
    %c0_i32_1 = arith.constant 0 : i32
    return %c0_i32, %c0_i32_0 : i32, i32
  }
  func.func @transform_4(%arg0: i32) -> (i32, i32) {
    %c0_i32 = arith.constant 0 : i32
    %c0_i32_0 = arith.constant 0 : i32
    %c0_i32_1 = arith.constant 0 : i32
    return %c0_i32, %c0_i32_0 : i32, i32
  }
  func.func @transform_5(%arg0: i32) -> (i32, i32) {
    %c0_i32 = arith.constant 0 : i32
    %c0_i32_0 = arith.constant 0 : i32
    %c0_i32_1 = arith.constant 0 : i32
    return %c0_i32, %c0_i32_0 : i32, i32
  }
  func.func @transform_6(%arg0: i32) -> (i32, i32) {
    %c0_i32 = arith.constant 0 : i32
    %c0_i32_0 = arith.constant 0 : i32
    %c0_i32_1 = arith.constant 0 : i32
    return %c0_i32, %c0_i32_0 : i32, i32
  }
  func.func @transform_7(%arg0: i32) -> (i32, i32) {
    %c0_i32 = arith.constant 0 : i32
    %c0_i32_0 = arith.constant 0 : i32
    return %arg0, %c0_i32 : i32, i32
  }
}

</mosaic_0001>

<llo_original>
// kernel: tpu_custom_call.1
$region0: #{tpu_custom_call.1}
  #allocation0 [shape = 'u32[]', space=smem, size = 0x4, offset = 0x4, fixed_abs, tag = 'smem constant byte address 0x4 - core index']
  #allocation1 [shape = 'u32[144,128]{1,0:T(1,128)}', space=vmem, size = 0x12000, scoped, tag = 'internal scratch']
  %s0 = inlined_call_operand.vmem [shape: f32[8,128], index: 0, kind: input, shape index: {}]
  %s1 = inlined_call_operand.hbm [shape: bf16[128,256], index: 1, kind: input, shape index: {}]
  %s2 = inlined_call_operand.vmem [shape: f32[1,256], index: 2, kind: input, shape index: {}]
  %s3 = inlined_call_operand.hbm [shape: bf16[256,128], index: 3, kind: input, shape index: {}]
  %s4 = inlined_call_operand.vmem [shape: f32[1,128], index: 4, kind: input, shape index: {}]
  %s5 = inlined_call_operand.vmem [shape: bf16[128,64], index: 5, kind: input, shape index: {}]
  %s6 = inlined_call_operand.vmem [shape: f32[1,64], index: 6, kind: input, shape index: {}]
  %s7 = inlined_call_operand.hbm [shape: f32[8,64], index: 7, kind: output, shape index: {}]
  %s8 = sld [smem:[#allocation0]]
  $region46: #{tpu_custom_call.1} parent=0
    _
  %s10 = ssub.s32 1, %s8
  %s11 = scalar_select 0, %s10, %s8
  $region1: #{tpu_custom_call.1} parent=0
    #allocation2 [shape = 'u8[65536]{0}', space=vmem, size = 0x10000, scoped, tag = 'input window, operand 1, single buffered']
    #allocation3 [shape = 's32[1]{0}', space=sflag, size = 0x4, scoped, tag = 'scoped memory for tpu_custom_call.1']
    #allocation4 [shape = 's32[1]{0}', space=sflag, size = 0x4, scoped, tag = 'scoped memory for tpu_custom_call.1']
    #allocation5 [shape = 'u8[65536]{0}', space=vmem, size = 0x10000, scoped, tag = 'input window, operand 3, single buffered']
    #allocation6 [shape = 's32[1]{0}', space=sflag, size = 0x4, scoped, tag = 'scoped memory for tpu_custom_call.1']
    #allocation7 [shape = 'u8[4096]{0}', space=vmem, size = 0x1000, scoped, tag = 'output window, operand 0, single buffered']
    %12 = vsyncpa [#allocation3], 0
    %13 = vsyncpa [#allocation6], 0
    %14 = vsyncpa [#allocation4], 0
    // Predicated region
    $region2: #{tpu_custom_call.1} parent=1 // pred_check
      _
    $region3: #{tpu_custom_call.1} parent=1 // pred_check_branch
      %16 = sbr.rel (0) target = $region5
    $region4: #{tpu_custom_call.1} parent=1 // pred_region
      _
    $region5: #{tpu_custom_call.1} parent=1 // pred_fallthru
      _
    // Predicated region
    $region6: #{tpu_custom_call.1} parent=1 // pred_check
      _
    $region7: #{tpu_custom_call.1} parent=1 // pred_check_branch
      %18 = sbr.rel (0) target = $region9
    $region8: #{tpu_custom_call.1} parent=1 // pred_region
      %s20 = ssub.s32 2048, 2048
      %21 = vsyncadd [#allocation3], %s20
      %s22 = sshll.u32 [#allocation2], 4
      %s23 = int_to_ptr.vmem [resolvable:$true] %s22
      %28 = dma.hbm_to_vmem [thread:$0]  %s1, 2048, %s23, [#allocation3], 128, 128, 8
    $region9: #{tpu_custom_call.1} parent=1 // pred_fallthru
      _
    // Predicated region
    $region10: #{tpu_custom_call.1} parent=1 // pred_check
      _
    $region11: #{tpu_custom_call.1} parent=1 // pred_check_branch
      %30 = sbr.rel (0) target = $region13
    $region12: #{tpu_custom_call.1} parent=1 // pred_region
      _
    $region13: #{tpu_custom_call.1} parent=1 // pred_fallthru
      _
    // Predicated region
    $region14: #{tpu_custom_call.1} parent=1 // pred_check
      _
    $region15: #{tpu_custom_call.1} parent=1 // pred_check_branch
      %32 = sbr.rel (0) target = $region17
    $region16: #{tpu_custom_call.1} parent=1 // pred_region
      %s34 = ssub.s32 2048, 2048
      %35 = vsyncadd [#allocation6], %s34
      %s36 = sshll.u32 [#allocation5], 4
      %s37 = int_to_ptr.vmem [resolvable:$true] %s36
      %42 = dma.hbm_to_vmem [thread:$0]  %s3, 2048, %s37, [#allocation6], 64, 64, 4
    $region17: #{tpu_custom_call.1} parent=1 // pred_fallthru
      _
    // Predicated region
    $region18: #{tpu_custom_call.1} parent=1 // pred_check
      _
    $region19: #{tpu_custom_call.1} parent=1 // pred_check_branch
      %44 = sbr.rel (0) target = $region21
    $region20: #{tpu_custom_call.1} parent=1 // pred_region
      _
    $region21: #{tpu_custom_call.1} parent=1 // pred_fallthru
      _
    // Predicated region
    $region22: #{tpu_custom_call.1} parent=1 // pred_check
      _
    $region23: #{tpu_custom_call.1} parent=1 // pred_check_branch
      %46 = sbr.rel (0) target = $region25
    $region24: #{tpu_custom_call.1} parent=1 // pred_region
      _
    $region25: #{tpu_custom_call.1} parent=1 // pred_fallthru
      _
    // Predicated region
    $region26: #{tpu_custom_call.1} parent=1 // pred_check
      _
    $region27: #{tpu_custom_call.1} parent=1 // pred_check_branch
      %48 = sbr.rel (0) target = $region29
    $region28: #{tpu_custom_call.1} parent=1 // pred_region
      _
    $region29: #{tpu_custom_call.1} parent=1 // pred_fallthru
      _
    // Predicated region
    $region30: #{tpu_custom_call.1} parent=1 // pred_check
      _
    $region31: #{tpu_custom_call.1} parent=1 // pred_check_branch
      %50 = sbr.rel (0) target = $region33
    $region32: #{tpu_custom_call.1} parent=1 // pred_region
      %51 = dma.done [#allocation3], 2048
    $region33: #{tpu_custom_call.1} parent=1 // pred_fallthru
      _
    // Predicated region
    $region34: #{tpu_custom_call.1} parent=1 // pred_check
      _
    $region35: #{tpu_custom_call.1} parent=1 // pred_check_branch
      %53 = sbr.rel (0) target = $region37
    $region36: #{tpu_custom_call.1} parent=1 // pred_region
      %54 = dma.done [#allocation6], 2048
    $region37: #{tpu_custom_call.1} parent=1 // pred_fallthru
      _
    %v56 = vld [vmem:[%s0] sm:$0xff]
    %v57 = vpack.c.bf16 %v56, %v56
    %v58 = vld [vmem:[#allocation2] sm:$0xff]
    %v59 = vld [vmem:[#allocation2 + $0x8] sm:$0xff]
    %v60 = vld [vmem:[#allocation2 + $0x10] sm:$0xff]
    %v61 = vld [vmem:[#allocation2 + $0x18] sm:$0xff]
    %v62 = vld [vmem:[#allocation2 + $0x20] sm:$0xff]
    %v63 = vld [vmem:[#allocation2 + $0x28] sm:$0xff]
    %v64 = vld [vmem:[#allocation2 + $0x30] sm:$0xff]
    %v65 = vld [vmem:[#allocation2 + $0x38] sm:$0xff]
    %v66 = vld [vmem:[#allocation2 + $0x40] sm:$0xff]
    %v67 = vld [vmem:[#allocation2 + $0x48] sm:$0xff]
    %v68 = vld [vmem:[#allocation2 + $0x50] sm:$0xff]
    %v69 = vld [vmem:[#allocation2 + $0x58] sm:$0xff]
    %v70 = vld [vmem:[#allocation2 + $0x60] sm:$0xff]
    %v71 = vld [vmem:[#allocation2 + $0x68] sm:$0xff]
    %v72 = vld [vmem:[#allocation2 + $0x70] sm:$0xff]
    %v73 = vld [vmem:[#allocation2 + $0x78] sm:$0xff]
    %v74 = vld [vmem:[%s2] sm:$0x3]
    %v76 = vlaneseq
    %v77 = vshrl.u32 %v76, 7
    %v78 = vsub.s32 0, %v77
    %v79 = vrot.slane %v74, %v78
    %v80 = vlaneseq
    %v81 = vshrl.u32 %v80, 7
    %v82 = vsub.s32 1, %v81
    %v83 = vrot.slane %v74, %v82
    %v102 = vunpack.c.l.b16 %v58
    %v103 = vunpack.c.h.b16 %v58
    %v104 = vunpack.c.l.b16 %v59
    %v105 = vunpack.c.h.b16 %v59
    %v106 = vunpack.c.l.b16 %v60
    %v107 = vunpack.c.h.b16 %v60
    %v108 = vunpack.c.l.b16 %v61
    %v109 = vunpack.c.h.b16 %v61
    %v110 = vunpack.c.l.b16 %v62
    %v111 = vunpack.c.h.b16 %v62
    %v112 = vunpack.c.l.b16 %v63
    %v113 = vunpack.c.h.b16 %v63
    %v114 = vunpack.c.l.b16 %v64
    %v115 = vunpack.c.h.b16 %v64
    %v116 = vunpack.c.l.b16 %v65
    %v117 = vunpack.c.h.b16 %v65
    %v118 = vunpack.c.l.b16 %v66
    %v119 = vunpack.c.h.b16 %v66
    %v120 = vunpack.c.l.b16 %v67
    %v121 = vunpack.c.h.b16 %v67
    %v122 = vunpack.c.l.b16 %v68
    %v123 = vunpack.c.h.b16 %v68
    %v124 = vunpack.c.l.b16 %v69
    %v125 = vunpack.c.h.b16 %v69
    %v126 = vunpack.c.l.b16 %v70
    %v127 = vunpack.c.h.b16 %v70
    %v128 = vunpack.c.l.b16 %v71
    %v129 = vunpack.c.h.b16 %v71
    %v130 = vunpack.c.l.b16 %v72
    %v131 = vunpack.c.h.b16 %v72
    %v132 = vunpack.c.l.b16 %v73
    %v133 = vunpack.c.h.b16 %v73
    %v134 = vpack.c.b16 %v104, %v102
    %v135 = vpack.c.b16 %v105, %v103
    %v136 = vpack.c.b16 %v108, %v106
    %v137 = vpack.c.b16 %v109, %v107
    %v138 = vpack.c.b16 %v112, %v110
    %v139 = vpack.c.b16 %v113, %v111
    %v140 = vpack.c.b16 %v116, %v114
    %v141 = vpack.c.b16 %v117, %v115
    %v142 = vpack.c.b16 %v120, %v118
    %v143 = vpack.c.b16 %v121, %v119
    %v144 = vpack.c.b16 %v124, %v122
    %v145 = vpack.c.b16 %v125, %v123
    %v146 = vpack.c.b16 %v128, %v126
    %v147 = vpack.c.b16 %v129, %v127
    %v148 = vpack.c.b16 %v132, %v130
    %v149 = vpack.c.b16 %v133, %v131
    %166 = vmatprep.subr.bf16.mxu0 %v135
    %167 = vmatpush1.bf16.msra.mxu0 %v134
    %168 = vmatprep.subr.bf16.mxu0 %v137
    %169 = vmatpush1.bf16.msra.mxu0 %v136
    %170 = vmatprep.subr.bf16.mxu0 %v139
    %171 = vmatpush1.bf16.msra.mxu0 %v138
    %172 = vmatprep.subr.bf16.mxu0 %v141
    %173 = vmatpush1.bf16.msra.mxu0 %v140
    %174 = vmatprep.subr.bf16.mxu0 %v143
    %175 = vmatpush1.bf16.msra.mxu0 %v142
    %176 = vmatprep.subr.bf16.mxu0 %v145
    %177 = vmatpush1.bf16.msra.mxu0 %v144
    %178 = vmatprep.subr.bf16.mxu0 %v147
    %179 = vmatpush1.bf16.msra.mxu0 %v146
    %180 = vmatprep.subr.bf16.mxu0 %v149
    %181 = vmatpush1.bf16.msra.mxu0 %v148
    %182 = vmatprep.subr.bf16.mxu0 0
    %183 = vmatpush1.bf16.msra.mxu0 0
    %184 = vmatprep.subr.bf16.mxu0 0
    %185 = vmatpush1.bf16.msra.mxu0 0
    %186 = vmatprep.subr.bf16.mxu0 0
    %187 = vmatpush1.bf16.msra.mxu0 0
    %188 = vmatprep.subr.bf16.mxu0 0
    %189 = vmatpush1.bf16.msra.mxu0 0
    %190 = vmatprep.subr.bf16.mxu0 0
    %191 = vmatpush1.bf16.msra.mxu0 0
    %192 = vmatprep.subr.bf16.mxu0 0
    %193 = vmatpush1.bf16.msra.mxu0 0
    %194 = vmatprep.subr.bf16.mxu0 0
    %195 = vmatpush1.bf16.msra.mxu0 0
    %196 = vmatprep.subr.bf16.mxu0 0
    %197 = vmatpush1.bf16.msra.mxu0 0
    %198 = vmatprep.mubr.bf16.mxu0 0
    %199 = vmatmul.mubr.bf16.gmra.mrb[0].mxu0 %v57
    %v200 = vpop.f32.mrb[0].mxu0
    %v201 = vadd.f32 %v79, %v200
    %v202 = vpop.f32.mrb[0].mxu0
    %v203 = vadd.f32 %v83, %v202
    %v204 = vpop.f32.mrb[0].mxu0
    %v205 = vpop.f32.mrb[0].mxu0
    %206 = vdwg.mxu0
    %v207 = vmax.f32 %v201, 0.0
    %v208 = vmax.f32 %v203, 0.0
    %v209 = vpack.c.bf16 %v207, %v207
    %v210 = vpack.c.bf16 %v208, %v208
    %v211 = vld [vmem:[#allocation5] sm:$0xf]
    %v212 = vld [vmem:[#allocation5 + $0x4] sm:$0xf]
    %v213 = vld [vmem:[#allocation5 + $0x8] sm:$0xf]
    %v214 = vld [vmem:[#allocation5 + $0xc] sm:$0xf]
    %v215 = vld [vmem:[#allocation5 + $0x10] sm:$0xf]
    %v216 = vld [vmem:[#allocation5 + $0x14] sm:$0xf]
    %v217 = vld [vmem:[#allocation5 + $0x18] sm:$0xf]
    %v218 = vld [vmem:[#allocation5 + $0x1c] sm:$0xf]
    %v219 = vld [vmem:[#allocation5 + $0x20] sm:$0xf]
    %v220 = vld [vmem:[#allocation5 + $0x24] sm:$0xf]
    %v221 = vld [vmem:[#allocation5 + $0x28] sm:$0xf]
    %v222 = vld [vmem:[#allocation5 + $0x2c] sm:$0xf]
    %v223 = vld [vmem:[#allocation5 + $0x30] sm:$0xf]
    %v224 = vld [vmem:[#allocation5 + $0x34] sm:$0xf]
    %v225 = vld [vmem:[#allocation5 + $0x38] sm:$0xf]
    %v226 = vld [vmem:[#allocation5 + $0x3c] sm:$0xf]
    %v227 = vld [vmem:[#allocation5 + $0x40] sm:$0xf]
    %v228 = vld [vmem:[#allocation5 + $0x44] sm:$0xf]
    %v229 = vld [vmem:[#allocation5 + $0x48] sm:$0xf]
    %v230 = vld [vmem:[#allocation5 + $0x4c] sm:$0xf]
    %v231 = vld [vmem:[#allocation5 + $0x50] sm:$0xf]
    %v232 = vld [vmem:[#allocation5 + $0x54] sm:$0xf]
    %v233 = vld [vmem:[#allocation5 + $0x58] sm:$0xf]
    %v234 = vld [vmem:[#allocation5 + $0x5c] sm:$0xf]
    %v235 = vld [vmem:[#allocation5 + $0x60] sm:$0xf]
    %v236 = vld [vmem:[#allocation5 + $0x64] sm:$0xf]
    %v237 = vld [vmem:[#allocation5 + $0x68] sm:$0xf]
    %v238 = vld [vmem:[#allocation5 + $0x6c] sm:$0xf]
    %v239 = vld [vmem:[#allocation5 + $0x70] sm:$0xf]
    %v240 = vld [vmem:[#allocation5 + $0x74] sm:$0xf]
    %v241 = vld [vmem:[#allocation5 + $0x78] sm:$0xf]
    %v242 = vld [vmem:[#allocation5 + $0x7c] sm:$0xf]
    %v243 = vld [vmem:[%s4] sm:$0x1]
    %v245 = vlaneseq
    %v246 = vshrl.u32 %v245, 7
    %v247 = vsub.s32 0, %v246
    %v248 = vrot.slane %v243, %v247
    %v282 = vunpack.c.l.b16 %v211
    %v283 = vunpack.c.l.b16 %v212
    %v284 = vunpack.c.l.b16 %v213
    %v285 = vunpack.c.l.b16 %v214
    %v286 = vunpack.c.l.b16 %v215
    %v287 = vunpack.c.l.b16 %v216
    %v288 = vunpack.c.l.b16 %v217
    %v289 = vunpack.c.l.b16 %v218
    %v290 = vunpack.c.l.b16 %v219
    %v291 = vunpack.c.l.b16 %v220
    %v292 = vunpack.c.l.b16 %v221
    %v293 = vunpack.c.l.b16 %v222
    %v294 = vunpack.c.l.b16 %v223
    %v295 = vunpack.c.l.b16 %v224
    %v296 = vunpack.c.l.b16 %v225
    %v297 = vunpack.c.l.b16 %v226
    %v298 = vunpack.c.l.b16 %v227
    %v299 = vunpack.c.l.b16 %v228
    %v300 = vunpack.c.l.b16 %v229
    %v301 = vunpack.c.l.b16 %v230
    %v302 = vunpack.c.l.b16 %v231
    %v303 = vunpack.c.l.b16 %v232
    %v304 = vunpack.c.l.b16 %v233
    %v305 = vunpack.c.l.b16 %v234
    %v306 = vunpack.c.l.b16 %v235
    %v307 = vunpack.c.l.b16 %v236
    %v308 = vunpack.c.l.b16 %v237
    %v309 = vunpack.c.l.b16 %v238
    %v310 = vunpack.c.l.b16 %v239
    %v311 = vunpack.c.l.b16 %v240
    %v312 = vunpack.c.l.b16 %v241
    %v313 = vunpack.c.l.b16 %v242
    %v314 = vpack.c.b16 %v283, %v282
    %v315 = vpack.c.b16 %v285, %v284
    %v316 = vpack.c.b16 %v287, %v286
    %v317 = vpack.c.b16 %v289, %v288
    %v318 = vpack.c.b16 %v291, %v290
    %v319 = vpack.c.b16 %v293, %v292
    %v320 = vpack.c.b16 %v295, %v294
    %v321 = vpack.c.b16 %v297, %v296
    %v322 = vpack.c.b16 %v299, %v298
    %v323 = vpack.c.b16 %v301, %v300
    %v324 = vpack.c.b16 %v303, %v302
    %v325 = vpack.c.b16 %v305, %v304
    %v326 = vpack.c.b16 %v307, %v306
    %v327 = vpack.c.b16 %v309, %v308
    %v328 = vpack.c.b16 %v311, %v310
    %v329 = vpack.c.b16 %v313, %v312
    %346 = vmatprep.subr.bf16.mxu0 0
    %347 = vmatpush1.bf16.msra.mxu0 %v314
    %348 = vmatprep.subr.bf16.mxu0 0
    %349 = vmatpush1.bf16.msra.mxu0 %v315
    %350 = vmatprep.subr.bf16.mxu0 0
    %351 = vmatpush1.bf16.msra.mxu0 %v316
    %352 = vmatprep.subr.bf16.mxu0 0
    %353 = vmatpush1.bf16.msra.mxu0 %v317
    %354 = vmatprep.subr.bf16.mxu0 0
    %355 = vmatpush1.bf16.msra.mxu0 %v318
    %356 = vmatprep.subr.bf16.mxu0 0
    %357 = vmatpush1.bf16.msra.mxu0 %v319
    %358 = vmatprep.subr.bf16.mxu0 0
    %359 = vmatpush1.bf16.msra.mxu0 %v320
    %360 = vmatprep.subr.bf16.mxu0 0
    %361 = vmatpush1.bf16.msra.mxu0 %v321
    %362 = vmatprep.subr.bf16.mxu0 0
    %363 = vmatpush1.bf16.msra.mxu0 %v322
    %364 = vmatprep.subr.bf16.mxu0 0
    %365 = vmatpush1.bf16.msra.mxu0 %v323
    %366 = vmatprep.subr.bf16.mxu0 0
    %367 = vmatpush1.bf16.msra.mxu0 %v324
    %368 = vmatprep.subr.bf16.mxu0 0
    %369 = vmatpush1.bf16.msra.mxu0 %v325
    %370 = vmatprep.subr.bf16.mxu0 0
    %371 = vmatpush1.bf16.msra.mxu0 %v326
    %372 = vmatprep.subr.bf16.mxu0 0
    %373 = vmatpush1.bf16.msra.mxu0 %v327
    %374 = vmatprep.subr.bf16.mxu0 0
    %375 = vmatpush1.bf16.msra.mxu0 %v328
    %376 = vmatprep.subr.bf16.mxu0 0
    %377 = vmatpush1.bf16.msra.mxu0 %v329
    %378 = vmatprep.mubr.bf16.mxu0 %v210
    %379 = vmatmul.mubr.bf16.gmra.mrb[0].mxu0 %v209
    %v380 = vpop.f32.mrb[0].mxu0
    %v381 = vadd.f32 %v248, %v380
    %v382 = vpop.f32.mrb[0].mxu0
    %v383 = vpop.f32.mrb[0].mxu0
    %v384 = vpop.f32.mrb[0].mxu0
    %385 = vdwg.mxu0
    %v386 = vmax.f32 %v381, 0.0
    %v387 = vpack.c.bf16 %v386, %v386
    %v388 = vld [vmem:[%s5] sm:$0xf]
    %v389 = vld [vmem:[%s5 + $0x4] sm:$0xf]
    %v390 = vld [vmem:[%s5 + $0x8] sm:$0xf]
    %v391 = vld [vmem:[%s5 + $0xc] sm:$0xf]
    %v392 = vld [vmem:[%s5 + $0x10] sm:$0xf]
    %v393 = vld [vmem:[%s5 + $0x14] sm:$0xf]
    %v394 = vld [vmem:[%s5 + $0x18] sm:$0xf]
    %v395 = vld [vmem:[%s5 + $0x1c] sm:$0xf]
    %v396 = vld [vmem:[%s5 + $0x20] sm:$0xf]
    %v397 = vld [vmem:[%s5 + $0x24] sm:$0xf]
    %v398 = vld [vmem:[%s5 + $0x28] sm:$0xf]
    %v399 = vld [vmem:[%s5 + $0x2c] sm:$0xf]
    %v400 = vld [vmem:[%s5 + $0x30] sm:$0xf]
    %v401 = vld [vmem:[%s5 + $0x34] sm:$0xf]
    %v402 = vld [vmem:[%s5 + $0x38] sm:$0xf]
    %v403 = vld [vmem:[%s5 + $0x3c] sm:$0xf]
    %v404 = vld [vmem:[%s6] sm:$0x1]
    %v406 = vlaneseq
    %v407 = vshrl.u32 %v406, 7
    %v408 = vsub.s32 0, %v407
    %v409 = vrot.slane %v404, %v408
    %v427 = vunpack.c.l.b16 %v388
    %v428 = vunpack.c.l.b16 %v389
    %v429 = vunpack.c.l.b16 %v390
    %v430 = vunpack.c.l.b16 %v391
    %v431 = vunpack.c.l.b16 %v392
    %v432 = vunpack.c.l.b16 %v393
    %v433 = vunpack.c.l.b16 %v394
    %v434 = vunpack.c.l.b16 %v395
    %v435 = vunpack.c.l.b16 %v396
    %v436 = vunpack.c.l.b16 %v397
    %v437 = vunpack.c.l.b16 %v398
    %v438 = vunpack.c.l.b16 %v399
    %v439 = vunpack.c.l.b16 %v400
    %v440 = vunpack.c.l.b16 %v401
    %v441 = vunpack.c.l.b16 %v402
    %v442 = vunpack.c.l.b16 %v403
    %v443 = vpack.c.b16 %v428, %v427
    %v444 = vpack.c.b16 %v430, %v429
    %v445 = vpack.c.b16 %v432, %v431
    %v446 = vpack.c.b16 %v434, %v433
    %v447 = vpack.c.b16 %v436, %v435
    %v448 = vpack.c.b16 %v438, %v437
    %v449 = vpack.c.b16 %v440, %v439
    %v450 = vpack.c.b16 %v442, %v441
    %459 = vmatprep.subr.bf16.mxu0 0
    %460 = vmatpush1.bf16.msra.mxu0 %v443
    %461 = vmatprep.subr.bf16.mxu0 0
    %462 = vmatpush1.bf16.msra.mxu0 %v444
    %463 = vmatprep.subr.bf16.mxu0 0
    %464 = vmatpush1.bf16.msra.mxu0 %v445
    %465 = vmatprep.subr.bf16.mxu0 0
    %466 = vmatpush1.bf16.msra.mxu0 %v446
    %467 = vmatprep.subr.bf16.mxu0 0
    %468 = vmatpush1.bf16.msra.mxu0 %v447
    %469 = vmatprep.subr.bf16.mxu0 0
    %470 = vmatpush1.bf16.msra.mxu0 %v448
    %471 = vmatprep.subr.bf16.mxu0 0
    %472 = vmatpush1.bf16.msra.mxu0 %v449
    %473 = vmatprep.subr.bf16.mxu0 0
    %474 = vmatpush1.bf16.msra.mxu0 %v450
    %475 = vmatprep.subr.bf16.mxu0 0
    %476 = vmatpush1.bf16.msra.mxu0 0
    %477 = vmatprep.subr.bf16.mxu0 0
    %478 = vmatpush1.bf16.msra.mxu0 0
    %479 = vmatprep.subr.bf16.mxu0 0
    %480 = vmatpush1.bf16.msra.mxu0 0
    %481 = vmatprep.subr.bf16.mxu0 0
    %482 = vmatpush1.bf16.msra.mxu0 0
    %483 = vmatprep.subr.bf16.mxu0 0
    %484 = vmatpush1.bf16.msra.mxu0 0
    %485 = vmatprep.subr.bf16.mxu0 0
    %486 = vmatpush1.bf16.msra.mxu0 0
    %487 = vmatprep.subr.bf16.mxu0 0
    %488 = vmatpush1.bf16.msra.mxu0 0
    %489 = vmatprep.subr.bf16.mxu0 0
    %490 = vmatpush1.bf16.msra.mxu0 0
    %491 = vmatprep.mubr.bf16.mxu0 0
    %492 = vmatmul.mubr.bf16.gmra.mrb[0].mxu0 %v387
    %v493 = vpop.f32.mrb[0].mxu0
    %v494 = vadd.f32 %v409, %v493
    %v495 = vpop.f32.mrb[0].mxu0
    %v496 = vpop.f32.mrb[0].mxu0
    %v497 = vpop.f32.mrb[0].mxu0
    %498 = vdwg.mxu0
    %vm499 = vcmask 523264
    %500 = vst.msk [vmem:[#allocation7] sm:$0xff] %vm499, %v494
    // Predicated region
    $region38: #{tpu_custom_call.1} parent=1 // pred_check
      _
    $region39: #{tpu_custom_call.1} parent=1 // pred_check_branch
      %502 = sbr.rel (0) target = $region41
    $region40: #{tpu_custom_call.1} parent=1 // pred_region
      %s504 = ssub.s32 128, 128
      %505 = vsyncadd [#allocation4], %s504
      %s507 = sshll.u32 [#allocation7], 4
      %s508 = int_to_ptr.vmem [resolvable:$true] %s507
      %510 = dma.vmem_to_hbm [thread:$0]  %s508, 128, %s7, [#allocation4]
    $region41: #{tpu_custom_call.1} parent=1 // pred_fallthru
      _
    // Predicated region
    $region42: #{tpu_custom_call.1} parent=1 // pred_check
      _
    $region43: #{tpu_custom_call.1} parent=1 // pred_check_branch
      %512 = sbr.rel (0) target = $region45
    $region44: #{tpu_custom_call.1} parent=1 // pred_region
      %513 = dma.done [#allocation4], 128
    $region45: #{tpu_custom_call.1} parent=1 // pred_fallthru
      _
    %514 = vsyncpa [#allocation3], 1
    %515 = vsyncpa [#allocation6], 1
    %516 = vsyncpa [#allocation4], 1

</llo_original>
